<compile_context>
chip_gen: v7x
topology: tpu7x:2x2x1
jax: 0.10.0
libtpu: 0.0.40
codegen_flags: <defaults>
</compile_context>

<pallas_src>
import jax
import jax.numpy as jnp
from jax.experimental import pallas as pl
from jax.experimental.pallas import tpu as pltpu


def boxflownet_kernel(x_ref, w1_ref, b1_ref, w2_ref, b2_ref, w3_ref, b3_ref, o_ref):
    # x tile: (IN, TN) feature-major; IN is tiny (2), TN is the lane-dense batch tile.
    x = x_ref[...]                                   # (IN, TN) f32
    w1 = w1_ref[...]                                 # (H1, IN)
    in_features = x.shape[0]

    # ---- Layer 1: Linear(IN -> H1) + Tanh -----------------------------------
    # K = IN (= 2) contraction: do it as broadcast-FMAs on the VPU instead of an
    # MXU push at <2% array utilization.
    h = b1_ref[...].astype(jnp.float32)              # (H1, 1) -> broadcasts to (H1, TN)
    for k in range(in_features):                     # static unroll (IN is tiny)
        h = h + w1[:, k:k + 1] * x[k:k + 1, :]       # (H1,1)*(1,TN) -> (H1,TN)
    # TODO(synk): if the bundle dump shows EUP-bound, swap one tanh for a VPU
    # rational approximation to split the transcendental load.
    h = jnp.tanh(h)                                  # (H1, TN)

    # ---- Layer 2: Linear(H1 -> H2) + Tanh (MXU) -----------------------------
    h = jnp.dot(w2_ref[...], h, preferred_element_type=jnp.float32) + b2_ref[...]
    h = jnp.tanh(h)                                  # (H2, TN)

    # ---- Layer 3: Linear(H2 -> OUT), no activation (MXU) --------------------
    y = jnp.dot(w3_ref[...], h, preferred_element_type=jnp.float32) + b3_ref[...]

    o_ref[...] = y.astype(o_ref.dtype)               # (OUT, TN), lane-dense store


def boxflownet_forward(x, params, *, tile_n=1024):
    """x: (N, IN) f32.  params: PyTorch-layout weights (out, in) and biases (out, 1).

    Returns (N, OUT) f32, matching the nn.Linear chain semantics.
    """
    N, IN = x.shape
    w1, b1 = params["w1"], params["b1"]   # (H1, IN), (H1, 1)
    w2, b2 = params["w2"], params["b2"]   # (H2, H1), (H2, 1)
    w3, b3 = params["w3"], params["b3"]   # (OUT, H2), (OUT, 1)
    H1, H2, OUT = w1.shape[0], w2.shape[0], w3.shape[0]

    # Feature-major: (IN, N).  Pad the batch axis so it divides the lane tile.
    xt = x.T
    tile_n = max(128, min(int(tile_n), pl.cdiv(N, 128) * 128))   # multiple of 128
    n_pad = pl.cdiv(N, tile_n) * tile_n
    if n_pad != N:
        xt = jnp.pad(xt, ((0, 0), (0, n_pad - N)))

    grid = (n_pad // tile_n,)

    def batch_tile(i):
        return (0, i)

    def whole(i):
        return (0, 0)

    out_t = pl.pallas_call(
        boxflownet_kernel,
        out_shape=jax.ShapeDtypeStruct((OUT, n_pad), jnp.float32),
        grid_spec=pltpu.PrefetchScalarGridSpec(
            num_scalar_prefetch=0,
            grid=grid,
            in_specs=[
                pl.BlockSpec((IN, tile_n), batch_tile),   # x tile (feature-major)
                pl.BlockSpec((H1, IN), whole),            # w1 (resident)
                pl.BlockSpec((H1, 1), whole),             # b1
                pl.BlockSpec((H2, H1), whole),            # w2
                pl.BlockSpec((H2, 1), whole),             # b2
                pl.BlockSpec((OUT, H2), whole),           # w3
                pl.BlockSpec((OUT, 1), whole),            # b3
            ],
            out_specs=pl.BlockSpec((OUT, tile_n), batch_tile),
        ),
        compiler_params=pltpu.CompilerParams(
            dimension_semantics=("parallel",),            # megacore sharding on v7x
        ),
    )(xt, w1, b1, w2, b2, w3, b3)

    return out_t[:, :N].T                                 # back to (N, OUT)


def init_params(key, input_size, layer_sizes):
    """Kaiming-uniform-ish init matching nn.Linear default shapes.
    Weights kept in PyTorch layout (out_features, in_features); biases (out, 1)."""
    params = {}
    sizes = [input_size] + list(layer_sizes)
    for idx in range(len(layer_sizes)):
        fan_in, fan_out = sizes[idx], sizes[idx + 1]
        key, kw, kb = jax.random.split(key, 3)
        bound = 1.0 / jnp.sqrt(jnp.float32(fan_in))
        w = jax.random.uniform(kw, (fan_out, fan_in), jnp.float32, -bound, bound)
        b = jax.random.uniform(kb, (fan_out, 1), jnp.float32, -bound, bound)
        params[f"w{idx + 1}"] = w
        params[f"b{idx + 1}"] = b
    return params


def reference_forward(x, params):
    """Pure-JAX reference with PyTorch nn.Linear semantics: y = x @ W.T + b."""
    h = jnp.tanh(x @ params["w1"].T + params["b1"].T)
    h = jnp.tanh(h @ params["w2"].T + params["b2"].T)
    return h @ params["w3"].T + params["b3"].T


if __name__ == "__main__":
    key = jax.random.PRNGKey(0)
    k_x, k_p = jax.random.split(key)

    # Small shapes consistent with the module: input_size=2, layers [(32,Tanh),(32,Tanh),(3,None)]
    INPUT_SIZE = 2
    LAYER_SIZES = [32, 32, 3]
    N = 16  # small, non-multiple-of-128 batch -> exercises the ragged-tail padding path

    x = jax.random.normal(k_x, (N, INPUT_SIZE), jnp.float32)
    params = init_params(k_p, INPUT_SIZE, LAYER_SIZES)

    # lambda1 / lambda2 exist in __init__ but are unused in forward().
    lambda1 = jnp.float32(0.0)  # TODO(synk): only enters the PINN loss, not forward()
    lambda2 = jnp.float32(0.0)

    out = boxflownet_forward(x, params)
    out = jax.block_until_ready(out)

    ref = reference_forward(x, params)
    assert out.shape == (N, LAYER_SIZES[-1])
    assert jnp.allclose(out, ref, atol=1e-5, rtol=1e-5)

    print("KERNEL_OK")
</pallas_src>

<mosaic_0001>
module attributes {stable_mosaic.version = 11 : i64} {
  func.func @boxflownet_kernel(%arg0: i32, %arg1: memref<2x128xf32, #tpu.memory_space<vmem>>, %arg2: memref<32x2xf32, #tpu.memory_space<vmem>>, %arg3: memref<32x1xf32, #tpu.memory_space<vmem>>, %arg4: memref<32x32xf32, #tpu.memory_space<vmem>>, %arg5: memref<32x1xf32, #tpu.memory_space<vmem>>, %arg6: memref<3x32xf32, #tpu.memory_space<vmem>>, %arg7: memref<3x1xf32, #tpu.memory_space<vmem>>, %arg8: memref<3x128xf32, #tpu.memory_space<vmem>>) attributes {dimension_semantics = [#tpu.dimension_semantics<parallel>], iteration_bounds = array<i64: 1>, scalar_prefetch = 0 : i64, scratch_operands = 0 : i64, tpu.core_type = #tpu.core_type<tc>, window_params = [{transform_indices = @transform_0, window_bounds = array<i64: 2, 128>}, {pipeline_mode = #tpu.pipeline_mode<synchronous>, transform_indices = @transform_1, window_bounds = array<i64: 32, 2>}, {pipeline_mode = #tpu.pipeline_mode<synchronous>, transform_indices = @transform_2, window_bounds = array<i64: 32, 1>}, {pipeline_mode = #tpu.pipeline_mode<synchronous>, transform_indices = @transform_3, window_bounds = array<i64: 32, 32>}, {pipeline_mode = #tpu.pipeline_mode<synchronous>, transform_indices = @transform_4, window_bounds = array<i64: 32, 1>}, {pipeline_mode = #tpu.pipeline_mode<synchronous>, transform_indices = @transform_5, window_bounds = array<i64: 3, 32>}, {pipeline_mode = #tpu.pipeline_mode<synchronous>, transform_indices = @transform_6, window_bounds = array<i64: 3, 1>}, {transform_indices = @transform_7, window_bounds = array<i64: 3, 128>}]} {
    %c0 = arith.constant 0 : index
    %c0_0 = arith.constant 0 : index
    %0 = vector.load %arg1[%c0, %c0_0] : memref<2x128xf32, #tpu.memory_space<vmem>>, vector<2x128xf32>
    %c0_1 = arith.constant 0 : index
    %c0_2 = arith.constant 0 : index
    %1 = vector.load %arg2[%c0_1, %c0_2] : memref<32x2xf32, #tpu.memory_space<vmem>>, vector<32x2xf32>
    %c0_3 = arith.constant 0 : index
    %c0_4 = arith.constant 0 : index
    %2 = vector.load %arg3[%c0_3, %c0_4] : memref<32x1xf32, #tpu.memory_space<vmem>>, vector<32x1xf32>
    %3 = vector.extract_strided_slice %1 {offsets = [0, 0], sizes = [32, 1], strides = [1, 1]} : vector<32x2xf32> to vector<32x1xf32>
    %4 = vector.extract_strided_slice %0 {offsets = [0, 0], sizes = [1, 128], strides = [1, 1]} : vector<2x128xf32> to vector<1x128xf32>
    %5 = vector.broadcast %3 : vector<32x1xf32> to vector<32x128xf32>
    %6 = vector.broadcast %4 : vector<1x128xf32> to vector<32x128xf32>
    %7 = arith.mulf %5, %6 : vector<32x128xf32>
    %8 = vector.broadcast %2 : vector<32x1xf32> to vector<32x128xf32>
    %9 = arith.addf %8, %7 : vector<32x128xf32>
    %10 = vector.extract_strided_slice %1 {offsets = [0, 1], sizes = [32, 1], strides = [1, 1]} : vector<32x2xf32> to vector<32x1xf32>
    %11 = vector.extract_strided_slice %0 {offsets = [1, 0], sizes = [1, 128], strides = [1, 1]} : vector<2x128xf32> to vector<1x128xf32>
    %12 = vector.broadcast %10 : vector<32x1xf32> to vector<32x128xf32>
    %13 = vector.broadcast %11 : vector<1x128xf32> to vector<32x128xf32>
    %14 = arith.mulf %12, %13 : vector<32x128xf32>
    %15 = arith.addf %9, %14 : vector<32x128xf32>
    %16 = math.tanh %15 : vector<32x128xf32>
    %c0_5 = arith.constant 0 : index
    %c0_6 = arith.constant 0 : index
    %17 = vector.load %arg4[%c0_5, %c0_6] : memref<32x32xf32, #tpu.memory_space<vmem>>, vector<32x32xf32>
    %cst = arith.constant dense<0.000000e+00> : vector<32x128xf32>
    %18 = tpu.matmul %17, %16, %cst {dimension_numbers = #tpu.dot_dimension_numbers<[1], [0], [0], [1], [0, 0, 1, 1], [], []>} : vector<32x32xf32>, vector<32x128xf32>, vector<32x128xf32> -> vector<32x128xf32>
    %c0_7 = arith.constant 0 : index
    %c0_8 = arith.constant 0 : index
    %19 = vector.load %arg5[%c0_7, %c0_8] : memref<32x1xf32, #tpu.memory_space<vmem>>, vector<32x1xf32>
    %20 = vector.broadcast %19 : vector<32x1xf32> to vector<32x128xf32>
    %21 = arith.addf %18, %20 : vector<32x128xf32>
    %22 = math.tanh %21 : vector<32x128xf32>
    %c0_9 = arith.constant 0 : index
    %c0_10 = arith.constant 0 : index
    %23 = vector.load %arg6[%c0_9, %c0_10] : memref<3x32xf32, #tpu.memory_space<vmem>>, vector<3x32xf32>
    %cst_11 = arith.constant dense<0.000000e+00> : vector<3x128xf32>
    %24 = tpu.matmul %23, %22, %cst_11 {dimension_numbers = #tpu.dot_dimension_numbers<[1], [0], [0], [1], [0, 0, 1, 1], [], []>} : vector<3x32xf32>, vector<32x128xf32>, vector<3x128xf32> -> vector<3x128xf32>
    %c0_12 = arith.constant 0 : index
    %c0_13 = arith.constant 0 : index
    %25 = vector.load %arg7[%c0_12, %c0_13] : memref<3x1xf32, #tpu.memory_space<vmem>>, vector<3x1xf32>
    %26 = vector.broadcast %25 : vector<3x1xf32> to vector<3x128xf32>
    %27 = arith.addf %24, %26 : vector<3x128xf32>
    %c0_14 = arith.constant 0 : index
    %c0_15 = arith.constant 0 : index
    %28 = vector.load %arg8[%c0_14, %c0_15] : memref<3x128xf32, #tpu.memory_space<vmem>>, vector<3x128xf32>
    tpu.vector_store %arg8[%c0_14, %c0_15], %27 {strides = array<i32>} : memref<3x128xf32, #tpu.memory_space<vmem>>, vector<3x128xf32>,
    return
  }
  func.func @transform_0(%arg0: i32) -> (i32, i32) {
    %c0_i32 = arith.constant 0 : i32
    %c0_i32_0 = arith.constant 0 : i32
    return %c0_i32, %arg0 : i32, i32
  }
  func.func @transform_1(%arg0: i32) -> (i32, i32) {
    %c0_i32 = arith.constant 0 : i32
    %c0_i32_0 = arith.constant 0 : i32
    %c0_i32_1 = arith.constant 0 : i32
    return %c0_i32, %c0_i32_0 : i32, i32
  }
  func.func @transform_2(%arg0: i32) -> (i32, i32) {
    %c0_i32 = arith.constant 0 : i32
    %c0_i32_0 = arith.constant 0 : i32
    %c0_i32_1 = arith.constant 0 : i32
    return %c0_i32, %c0_i32_0 : i32, i32
  }
  func.func @transform_3(%arg0: i32) -> (i32, i32) {
    %c0_i32 = arith.constant 0 : i32
    %c0_i32_0 = arith.constant 0 : i32
    %c0_i32_1 = arith.constant 0 : i32
    return %c0_i32, %c0_i32_0 : i32, i32
  }
  func.func @transform_4(%arg0: i32) -> (i32, i32) {
    %c0_i32 = arith.constant 0 : i32
    %c0_i32_0 = arith.constant 0 : i32
    %c0_i32_1 = arith.constant 0 : i32
    return %c0_i32, %c0_i32_0 : i32, i32
  }
  func.func @transform_5(%arg0: i32) -> (i32, i32) {
    %c0_i32 = arith.constant 0 : i32
    %c0_i32_0 = arith.constant 0 : i32
    %c0_i32_1 = arith.constant 0 : i32
    return %c0_i32, %c0_i32_0 : i32, i32
  }
  func.func @transform_6(%arg0: i32) -> (i32, i32) {
    %c0_i32 = arith.constant 0 : i32
    %c0_i32_0 = arith.constant 0 : i32
    %c0_i32_1 = arith.constant 0 : i32
    return %c0_i32, %c0_i32_0 : i32, i32
  }
  func.func @transform_7(%arg0: i32) -> (i32, i32) {
    %c0_i32 = arith.constant 0 : i32
    %c0_i32_0 = arith.constant 0 : i32
    return %c0_i32, %arg0 : i32, i32
  }
}

</mosaic_0001>

<llo_original>
// kernel: tpu_custom_call.1
$region0: #{tpu_custom_call.1}
  #allocation0 [shape = 'u32[]', space=smem, size = 0x4, offset = 0x4, fixed_abs, tag = 'smem constant byte address 0x4 - core index']
  #allocation1 [shape = 'u32[144,128]{1,0:T(1,128)}', space=vmem, size = 0x12000, scoped, tag = 'internal scratch']
  %s0 = inlined_call_operand.vmem [shape: f32[2,128], index: 0, kind: input, shape index: {}]
  %s1 = inlined_call_operand.vmem [shape: f32[32,2], index: 1, kind: input, shape index: {}]
  %s2 = inlined_call_operand.vmem [shape: f32[32,1], index: 2, kind: input, shape index: {}]
  %s3 = inlined_call_operand.vmem [shape: f32[32,32], index: 3, kind: input, shape index: {}]
  %s4 = inlined_call_operand.vmem [shape: f32[32,1], index: 4, kind: input, shape index: {}]
  %s5 = inlined_call_operand.vmem [shape: f32[3,32], index: 5, kind: input, shape index: {}]
  %s6 = inlined_call_operand.vmem [shape: f32[3,1], index: 6, kind: input, shape index: {}]
  %s7 = inlined_call_operand.hbm [shape: f32[3,128], index: 7, kind: output, shape index: {}]
  %s8 = sld [smem:[#allocation0]]
  $region38: #{tpu_custom_call.1} parent=0
    _
  %s10 = ssub.s32 1, %s8
  %s11 = scalar_select 0, %s10, %s8
  $region1: #{tpu_custom_call.1} parent=0
    #allocation2 [shape = 'u8[2048]{0}', space=vmem, size = 0x800, scoped, tag = 'output window, operand 0, single buffered']
    #allocation3 [shape = 's32[1]{0}', space=sflag, size = 0x4, scoped, tag = 'scoped memory for tpu_custom_call.1']
    %12 = vsyncpa [#allocation3], 0
    // Predicated region
    $region2: #{tpu_custom_call.1} parent=1 // pred_check
      _
    $region3: #{tpu_custom_call.1} parent=1 // pred_check_branch
      %14 = sbr.rel (0) target = $region5
    $region4: #{tpu_custom_call.1} parent=1 // pred_region
      _
    $region5: #{tpu_custom_call.1} parent=1 // pred_fallthru
      _
    // Predicated region
    $region6: #{tpu_custom_call.1} parent=1 // pred_check
      _
    $region7: #{tpu_custom_call.1} parent=1 // pred_check_branch
      %16 = sbr.rel (0) target = $region9
    $region8: #{tpu_custom_call.1} parent=1 // pred_region
      _
    $region9: #{tpu_custom_call.1} parent=1 // pred_fallthru
      _
    // Predicated region
    $region10: #{tpu_custom_call.1} parent=1 // pred_check
      _
    $region11: #{tpu_custom_call.1} parent=1 // pred_check_branch
      %18 = sbr.rel (0) target = $region13
    $region12: #{tpu_custom_call.1} parent=1 // pred_region
      _
    $region13: #{tpu_custom_call.1} parent=1 // pred_fallthru
      _
    // Predicated region
    $region14: #{tpu_custom_call.1} parent=1 // pred_check
      _
    $region15: #{tpu_custom_call.1} parent=1 // pred_check_branch
      %20 = sbr.rel (0) target = $region17
    $region16: #{tpu_custom_call.1} parent=1 // pred_region
      _
    $region17: #{tpu_custom_call.1} parent=1 // pred_fallthru
      _
    // Predicated region
    $region18: #{tpu_custom_call.1} parent=1 // pred_check
      _
    $region19: #{tpu_custom_call.1} parent=1 // pred_check_branch
      %22 = sbr.rel (0) target = $region21
    $region20: #{tpu_custom_call.1} parent=1 // pred_region
      _
    $region21: #{tpu_custom_call.1} parent=1 // pred_fallthru
      _
    // Predicated region
    $region22: #{tpu_custom_call.1} parent=1 // pred_check
      _
    $region23: #{tpu_custom_call.1} parent=1 // pred_check_branch
      %24 = sbr.rel (0) target = $region25
    $region24: #{tpu_custom_call.1} parent=1 // pred_region
      _
    $region25: #{tpu_custom_call.1} parent=1 // pred_fallthru
      _
    // Predicated region
    $region26: #{tpu_custom_call.1} parent=1 // pred_check
      _
    $region27: #{tpu_custom_call.1} parent=1 // pred_check_branch
      %26 = sbr.rel (0) target = $region29
    $region28: #{tpu_custom_call.1} parent=1 // pred_region
      _
    $region29: #{tpu_custom_call.1} parent=1 // pred_fallthru
      _
    %v27 = vld [vmem:[%s0] sm:$0x3]
    %v28 = vld [vmem:[%s1] sm:$0xff]
    %v29 = vld [vmem:[%s1 + $0x8] sm:$0xff]
    %v30 = vld [vmem:[%s1 + $0x10] sm:$0xff]
    %v31 = vld [vmem:[%s1 + $0x18] sm:$0xff]
    %v32 = vld [vmem:[%s2] sm:$0xff]
    %v33 = vld [vmem:[%s2 + $0x8] sm:$0xff]
    %v34 = vld [vmem:[%s2 + $0x10] sm:$0xff]
    %v35 = vld [vmem:[%s2 + $0x18] sm:$0xff]
    %37 = vset.pattern.permute.xlu0 0
    %38 = vperm.xlu0 %37, %v28
    %v39 = vpop.permute.xlu0 %38
    %42 = vset.pattern.permute.xlu0 0
    %43 = vperm.xlu0 %42, %v29
    %v44 = vpop.permute.xlu0 %43
    %47 = vset.pattern.permute.xlu0 0
    %48 = vperm.xlu0 %47, %v30
    %v49 = vpop.permute.xlu0 %48
    %52 = vset.pattern.permute.xlu0 0
    %53 = vperm.xlu0 %52, %v31
    %v54 = vpop.permute.xlu0 %53
    %v56 = vlaneseq
    %v57 = vshrl.u32 %v56, 7
    %v58 = vsub.s32 0, %v57
    %v59 = vrot.slane %v27, %v58
    %v60 = vmul.f32 %v39, %v59
    %v61 = vmul.f32 %v44, %v59
    %v62 = vmul.f32 %v49, %v59
    %v63 = vmul.f32 %v54, %v59
    %65 = vset.pattern.permute.xlu0 0
    %66 = vperm.xlu0 %65, %v32
    %v67 = vpop.permute.xlu0 %66
    %70 = vset.pattern.permute.xlu0 0
    %71 = vperm.xlu0 %70, %v33
    %v72 = vpop.permute.xlu0 %71
    %75 = vset.pattern.permute.xlu0 0
    %76 = vperm.xlu0 %75, %v34
    %v77 = vpop.permute.xlu0 %76
    %80 = vset.pattern.permute.xlu0 0
    %81 = vperm.xlu0 %80, %v35
    %v82 = vpop.permute.xlu0 %81
    %v84 = vadd.f32 %v67, %v60
    %v85 = vadd.f32 %v72, %v61
    %v86 = vadd.f32 %v77, %v62
    %v87 = vadd.f32 %v82, %v63
    %88 = vset.pattern.permute.xlu0 1
    %89 = vperm.xlu0 %88, %v28
    %v90 = vpop.permute.xlu0 %89
    %92 = vset.pattern.permute.xlu0 1
    %93 = vperm.xlu0 %92, %v29
    %v94 = vpop.permute.xlu0 %93
    %96 = vset.pattern.permute.xlu0 1
    %97 = vperm.xlu0 %96, %v30
    %v98 = vpop.permute.xlu0 %97
    %100 = vset.pattern.permute.xlu0 1
    %101 = vperm.xlu0 %100, %v31
    %v102 = vpop.permute.xlu0 %101
    %v104 = vlaneseq
    %v105 = vshrl.u32 %v104, 7
    %v106 = vsub.s32 1, %v105
    %v107 = vrot.slane %v27, %v106
    %v108 = vmul.f32 %v90, %v107
    %v109 = vmul.f32 %v94, %v107
    %v110 = vmul.f32 %v98, %v107
    %v111 = vmul.f32 %v102, %v107
    %v112 = vadd.f32 %v84, %v108
    %v113 = vadd.f32 %v85, %v109
    %v114 = vadd.f32 %v86, %v110
    %v115 = vadd.f32 %v87, %v111
    %v116 = vtanh.pop %v112
    %v117 = vtanh.pop %v113
    %v118 = vtanh.pop %v114
    %v119 = vtanh.pop %v115
    %v120 = vld [vmem:[%s3] sm:$0xff]
    %v121 = vld [vmem:[%s3 + $0x8] sm:$0xff]
    %v122 = vld [vmem:[%s3 + $0x10] sm:$0xff]
    %v123 = vld [vmem:[%s3 + $0x18] sm:$0xff]
    %v124 = vld [vmem:[%s4] sm:$0xff]
    %v125 = vld [vmem:[%s4 + $0x8] sm:$0xff]
    %v126 = vld [vmem:[%s4 + $0x10] sm:$0xff]
    %v127 = vld [vmem:[%s4 + $0x18] sm:$0xff]
    %129 = vset.pattern.permute.xlu0 0
    %130 = vperm.xlu0 %129, %v124
    %v131 = vpop.permute.xlu0 %130
    %134 = vset.pattern.permute.xlu0 0
    %135 = vperm.xlu0 %134, %v125
    %v136 = vpop.permute.xlu0 %135
    %139 = vset.pattern.permute.xlu0 0
    %140 = vperm.xlu0 %139, %v126
    %v141 = vpop.permute.xlu0 %140
    %144 = vset.pattern.permute.xlu0 0
    %145 = vperm.xlu0 %144, %v127
    %v146 = vpop.permute.xlu0 %145
    %vm148 = vcmask 261120
    %v150 = vsel %vm148, %v120, 0
    %v153 = vsel %vm148, %v121, 0
    %v156 = vsel %vm148, %v122, 0
    %v159 = vsel %vm148, %v123, 0
    %161 = vmatprep.subr.mxu0 0.0
    %162 = vmatpush1.msra.mxu0 %v116
    %163 = vmatprep.subr.mxu0 0.0
    %164 = vmatpush1.msra.mxu0 %v117
    %165 = vmatprep.subr.mxu0 0.0
    %166 = vmatpush1.msra.mxu0 %v118
    %167 = vmatprep.subr.mxu0 0.0
    %168 = vmatpush1.msra.mxu0 %v119
    %169 = vmatprep.subr.mxu0 0.0
    %170 = vmatpush1.msra.mxu0 0.0
    %171 = vmatprep.subr.mxu0 0.0
    %172 = vmatpush1.msra.mxu0 0.0
    %173 = vmatprep.subr.mxu0 0.0
    %174 = vmatpush1.msra.mxu0 0.0
    %175 = vmatprep.subr.mxu0 0.0
    %176 = vmatpush1.msra.mxu0 0.0
    %177 = vmatprep.subr.mxu0 0.0
    %178 = vmatpush1.msra.mxu0 0.0
    %179 = vmatprep.subr.mxu0 0.0
    %180 = vmatpush1.msra.mxu0 0.0
    %181 = vmatprep.subr.mxu0 0.0
    %182 = vmatpush1.msra.mxu0 0.0
    %183 = vmatprep.subr.mxu0 0.0
    %184 = vmatpush1.msra.mxu0 0.0
    %185 = vmatprep.subr.mxu0 0.0
    %186 = vmatpush1.msra.mxu0 0.0
    %187 = vmatprep.subr.mxu0 0.0
    %188 = vmatpush1.msra.mxu0 0.0
    %189 = vmatprep.subr.mxu0 0.0
    %190 = vmatpush1.msra.mxu0 0.0
    %191 = vmatprep.subr.mxu0 0.0
    %192 = vmatpush1.msra.mxu0 0.0
    %193 = vmatprep.subr.mxu0 0.0
    %194 = vmatpush1.msra.mxu0 0.0
    %195 = vmatprep.subr.mxu0 0.0
    %196 = vmatpush1.msra.mxu0 0.0
    %197 = vmatprep.subr.mxu0 0.0
    %198 = vmatpush1.msra.mxu0 0.0
    %199 = vmatprep.subr.mxu0 0.0
    %200 = vmatpush1.msra.mxu0 0.0
    %201 = vmatprep.subr.mxu0 0.0
    %202 = vmatpush1.msra.mxu0 0.0
    %203 = vmatprep.subr.mxu0 0.0
    %204 = vmatpush1.msra.mxu0 0.0
    %205 = vmatprep.subr.mxu0 0.0
    %206 = vmatpush1.msra.mxu0 0.0
    %207 = vmatprep.subr.mxu0 0.0
    %208 = vmatpush1.msra.mxu0 0.0
    %209 = vmatprep.subr.mxu0 0.0
    %210 = vmatpush1.msra.mxu0 0.0
    %211 = vmatprep.subr.mxu0 0.0
    %212 = vmatpush1.msra.mxu0 0.0
    %213 = vmatprep.subr.mxu0 0.0
    %214 = vmatpush1.msra.mxu0 0.0
    %215 = vmatprep.subr.mxu0 0.0
    %216 = vmatpush1.msra.mxu0 0.0
    %217 = vmatprep.subr.mxu0 0.0
    %218 = vmatpush1.msra.mxu0 0.0
    %219 = vmatprep.subr.mxu0 0.0
    %220 = vmatpush1.msra.mxu0 0.0
    %221 = vmatprep.subr.mxu0 0.0
    %222 = vmatpush1.msra.mxu0 0.0
    %223 = vmatprep.subr.mxu0 0.0
    %224 = vmatpush1.msra.mxu0 0.0
    %225 = vmatprep.mubr.f32.mxu0 0.0
    %226 = vmatmul.mubr.f32.gmra.mrb[0].mxu0 %v150
    %v227 = vpop.f32.mrb[0].mxu0
    %v228 = vadd.f32 %v131, %v227
    %v229 = vpop.f32.mrb[0].mxu0
    %230 = vmatprep.mubr.f32.mxu0 0.0
    %231 = vmatmul.mubr.f32.gmra.mrb[0].mxu0 %v153
    %v232 = vpop.f32.mrb[0].mxu0
    %v233 = vadd.f32 %v136, %v232
    %v234 = vpop.f32.mrb[0].mxu0
    %235 = vmatprep.mubr.f32.mxu0 0.0
    %236 = vmatmul.mubr.f32.gmra.mrb[0].mxu0 %v156
    %v237 = vpop.f32.mrb[0].mxu0
    %v238 = vadd.f32 %v141, %v237
    %v239 = vpop.f32.mrb[0].mxu0
    %240 = vmatprep.mubr.f32.mxu0 0.0
    %241 = vmatmul.mubr.f32.gmra.mrb[0].mxu0 %v159
    %v242 = vpop.f32.mrb[0].mxu0
    %v243 = vadd.f32 %v146, %v242
    %v244 = vpop.f32.mrb[0].mxu0
    %245 = vdwg.mxu0
    %v246 = vtanh.pop %v228
    %v247 = vtanh.pop %v233
    %v248 = vtanh.pop %v238
    %v249 = vtanh.pop %v243
    %v250 = vld [vmem:[%s5] sm:$0x7]
    %v251 = vld [vmem:[%s6] sm:$0x7]
    %253 = vset.pattern.permute.xlu0 0
    %254 = vperm.xlu0 %253, %v251
    %v255 = vpop.permute.xlu0 %254
    %v258 = vsel %vm148, %v250, 0
    %260 = vmatprep.subr.mxu0 0.0
    %261 = vmatpush1.msra.mxu0 %v246
    %262 = vmatprep.subr.mxu0 0.0
    %263 = vmatpush1.msra.mxu0 %v247
    %264 = vmatprep.subr.mxu0 0.0
    %265 = vmatpush1.msra.mxu0 %v248
    %266 = vmatprep.subr.mxu0 0.0
    %267 = vmatpush1.msra.mxu0 %v249
    %268 = vmatprep.subr.mxu0 0.0
    %269 = vmatpush1.msra.mxu0 0.0
    %270 = vmatprep.subr.mxu0 0.0
    %271 = vmatpush1.msra.mxu0 0.0
    %272 = vmatprep.subr.mxu0 0.0
    %273 = vmatpush1.msra.mxu0 0.0
    %274 = vmatprep.subr.mxu0 0.0
    %275 = vmatpush1.msra.mxu0 0.0
    %276 = vmatprep.subr.mxu0 0.0
    %277 = vmatpush1.msra.mxu0 0.0
    %278 = vmatprep.subr.mxu0 0.0
    %279 = vmatpush1.msra.mxu0 0.0
    %280 = vmatprep.subr.mxu0 0.0
    %281 = vmatpush1.msra.mxu0 0.0
    %282 = vmatprep.subr.mxu0 0.0
    %283 = vmatpush1.msra.mxu0 0.0
    %284 = vmatprep.subr.mxu0 0.0
    %285 = vmatpush1.msra.mxu0 0.0
    %286 = vmatprep.subr.mxu0 0.0
    %287 = vmatpush1.msra.mxu0 0.0
    %288 = vmatprep.subr.mxu0 0.0
    %289 = vmatpush1.msra.mxu0 0.0
    %290 = vmatprep.subr.mxu0 0.0
    %291 = vmatpush1.msra.mxu0 0.0
    %292 = vmatprep.subr.mxu0 0.0
    %293 = vmatpush1.msra.mxu0 0.0
    %294 = vmatprep.subr.mxu0 0.0
    %295 = vmatpush1.msra.mxu0 0.0
    %296 = vmatprep.subr.mxu0 0.0
    %297 = vmatpush1.msra.mxu0 0.0
    %298 = vmatprep.subr.mxu0 0.0
    %299 = vmatpush1.msra.mxu0 0.0
    %300 = vmatprep.subr.mxu0 0.0
    %301 = vmatpush1.msra.mxu0 0.0
    %302 = vmatprep.subr.mxu0 0.0
    %303 = vmatpush1.msra.mxu0 0.0
    %304 = vmatprep.subr.mxu0 0.0
    %305 = vmatpush1.msra.mxu0 0.0
    %306 = vmatprep.subr.mxu0 0.0
    %307 = vmatpush1.msra.mxu0 0.0
    %308 = vmatprep.subr.mxu0 0.0
    %309 = vmatpush1.msra.mxu0 0.0
    %310 = vmatprep.subr.mxu0 0.0
    %311 = vmatpush1.msra.mxu0 0.0
    %312 = vmatprep.subr.mxu0 0.0
    %313 = vmatpush1.msra.mxu0 0.0
    %314 = vmatprep.subr.mxu0 0.0
    %315 = vmatpush1.msra.mxu0 0.0
    %316 = vmatprep.subr.mxu0 0.0
    %317 = vmatpush1.msra.mxu0 0.0
    %318 = vmatprep.subr.mxu0 0.0
    %319 = vmatpush1.msra.mxu0 0.0
    %320 = vmatprep.subr.mxu0 0.0
    %321 = vmatpush1.msra.mxu0 0.0
    %322 = vmatprep.subr.mxu0 0.0
    %323 = vmatpush1.msra.mxu0 0.0
    %324 = vmatprep.mubr.f32.mxu0 0.0
    %325 = vmatmul.mubr.f32.gmra.mrb[0].mxu0 %v258
    %v326 = vpop.f32.mrb[0].mxu0
    %v327 = vadd.f32 %v255, %v326
    %v328 = vpop.f32.mrb[0].mxu0
    %329 = vdwg.mxu0
    %330 = vst [vmem:[#allocation2] sm:$0x7] %v327
    // Predicated region
    $region30: #{tpu_custom_call.1} parent=1 // pred_check
      _
    $region31: #{tpu_custom_call.1} parent=1 // pred_check_branch
      %332 = sbr.rel (0) target = $region33
    $region32: #{tpu_custom_call.1} parent=1 // pred_region
      %s334 = ssub.s32 64, 64
      %335 = vsyncadd [#allocation3], %s334
      %s337 = sshll.u32 [#allocation2], 4
      %s338 = int_to_ptr.vmem [resolvable:$true] %s337
      %340 = dma.vmem_to_hbm [thread:$0]  %s338, 64, %s7, [#allocation3]
    $region33: #{tpu_custom_call.1} parent=1 // pred_fallthru
      _
    // Predicated region
    $region34: #{tpu_custom_call.1} parent=1 // pred_check
      _
    $region35: #{tpu_custom_call.1} parent=1 // pred_check_branch
      %342 = sbr.rel (0) target = $region37
    $region36: #{tpu_custom_call.1} parent=1 // pred_region
      %343 = dma.done [#allocation3], 64
    $region37: #{tpu_custom_call.1} parent=1 // pred_fallthru
      _
    %344 = vsyncpa [#allocation3], 1

</llo_original>
